<compile_context>
chip_gen: v6e
topology: v6e:2x2x1
jax: 0.10.0
libtpu: 0.0.40
codegen_flags: <defaults>
</compile_context>

<pallas_src>
import functools

import jax
import jax.numpy as jnp
from jax.experimental import pallas as pl
from jax.experimental.pallas import tpu as pltpu

TILE_C = 128                       # lanes
MAX_TILE_ROWS = 4096               # sublanes per block (multiple of 32)
VMEM_LIMIT_BYTES = 32 * 1024 * 1024


def _round_up(x, m):
    return ((x + m - 1) // m) * m


def _default_num_splits():
    # v7x has 2 TensorCores sharing 3.2 TB/s HBM -> split row-tiles across
    # them. On single-TC v5e/v6e a split is pure overhead.
    try:
        kind = jax.devices()[0].device_kind.lower()
    except Exception:
        return 1
    return 2 if ("v7" in kind or "tpu7" in kind) else 1


def _dice_kernel(x_ref, t_ref, o_ref, *, sps, tile_r, n_rows_full, rem,
                 nblocks, mask_boundary, has_clamped):
    c = pl.program_id(0)
    i = pl.program_id(1)
    b = c * sps + i                          # logical row-block index

    @pl.when(i == 0)
    def _init():
        o_ref[...] = jnp.zeros_like(o_ref)

    def accumulate(apply_mask):
        s = jax.nn.sigmoid(x_ref[...].astype(jnp.float32))
        t = t_ref[...].astype(jnp.float32)
        if apply_mask:
            # Only the single block containing the array boundary pays for
            # this: zeroes reshape padding and Pallas partial-block garbage.
            rows_io = jax.lax.broadcasted_iota(jnp.int32, (tile_r, TILE_C), 0)
            cols_io = jax.lax.broadcasted_iota(jnp.int32, (tile_r, TILE_C), 1)
            row_g = b * tile_r + rows_io
            valid = (row_g < n_rows_full) | ((row_g == n_rows_full) &
                                             (cols_io < rem))
            s = jnp.where(valid, s, 0.0)
            t = jnp.where(valid, t, 0.0)

        def fold(v):  # (tile_r, 128) -> (8, 128): tile-aligned reshape + adds
            return v.reshape(tile_r // 8, 8, TILE_C).sum(axis=0)

        # Dice only needs sum(s*t) and sum(s)+sum(t) -> two accumulators,
        # written directly into the (resident) output block.
        o_ref[0, 0, :, :] += fold(s * t)
        o_ref[0, 1, :, :] += fold(s + t)

    if mask_boundary:
        @pl.when(b == nblocks - 1)
        def _boundary():
            accumulate(True)

        interior = b != nblocks - 1
        if has_clamped:
            interior = interior & (b < nblocks)   # skip clamped duplicates

        @pl.when(interior)
        def _interior():
            accumulate(False)
    elif has_clamped:
        @pl.when(b < nblocks)
        def _all():
            accumulate(False)
    else:
        accumulate(False)


def dice_loss(inputs, targets, smooth=1.0, *, max_tile_rows=MAX_TILE_ROWS,
              num_splits=None):
    """Pallas implementation of DiceLoss.forward (returns a scalar f32)."""
    x = inputs.reshape(-1)           # native dtype; cast to f32 in-kernel
    t = targets.reshape(-1)
    n = x.shape[0]

    rem = n % TILE_C
    n_rows_full = n // TILE_C
    rows = pl.cdiv(n, TILE_C)
    if rem:
        # Ragged tail only: pad to the next multiple of 128 so the lane-dense
        # 2-D view exists. Padded values are masked in-kernel; with
        # allow_input_fusion this pad can fuse into the kernel operands.
        pad = rows * TILE_C - n
        x = jnp.pad(x, (0, pad))
        t = jnp.pad(t, (0, pad))
    x2 = x.reshape(rows, TILE_C)
    t2 = t.reshape(rows, TILE_C)

    # Row-tile as a multiple of 32 so bf16/int8 inputs keep native sublane
    # packing (32 is also a multiple of the f32 sublane tile of 8).
    tile_r = min(_round_up(max_tile_rows, 32), _round_up(rows, 32))
    nblocks = pl.cdiv(rows, tile_r)
    nsplit = num_splits if num_splits is not None else _default_num_splits()
    nsplit = max(1, min(nsplit, nblocks))
    sps = pl.cdiv(nblocks, nsplit)                 # row-blocks per split
    has_clamped = (nsplit * sps) != nblocks
    mask_boundary = (rem != 0) or (rows % tile_r != 0)

    def in_map(c, i):
        # Clamp duplicate blocks past the end; their accumulation is skipped.
        return (jnp.minimum(c * sps + i, nblocks - 1), 0)

    kernel = functools.partial(
        _dice_kernel, sps=sps, tile_r=tile_r, n_rows_full=n_rows_full,
        rem=rem, nblocks=nblocks, mask_boundary=mask_boundary,
        has_clamped=has_clamped)

    in_bytes = x2.size * x2.dtype.itemsize + t2.size * t2.dtype.itemsize
    out_bytes = nsplit * 2 * 8 * TILE_C * 4
    cost = pl.CostEstimate(
        flops=8 * n,              # sigmoid arith + mul + add + fold/accum
        transcendentals=2 * n,    # sigmoid ~ exp + reciprocal per element
        bytes_accessed=in_bytes + out_bytes)

    parts = pl.pallas_call(
        kernel,
        out_shape=jax.ShapeDtypeStruct((nsplit, 2, 8, TILE_C), jnp.float32),
        grid_spec=pltpu.PrefetchScalarGridSpec(
            num_scalar_prefetch=0,
            grid=(nsplit, sps),
            in_specs=[
                pl.BlockSpec((tile_r, TILE_C), in_map),
                pl.BlockSpec((tile_r, TILE_C), in_map),
            ],
            out_specs=pl.BlockSpec((1, 2, 8, TILE_C),
                                   lambda c, i: (c, 0, 0, 0)),
        ),
        compiler_params=pltpu.CompilerParams(
            dimension_semantics=("parallel", "arbitrary"),
            vmem_limit_bytes=VMEM_LIMIT_BYTES,
            allow_input_fusion=[True, True],
        ),
        cost_estimate=cost,
    )(x2, t2)

    intersection = jnp.sum(parts[:, 0])
    denom = jnp.sum(parts[:, 1])                   # sum(sigmoid(x)) + sum(t)
    dice = (2.0 * intersection + smooth) / (denom + smooth)
    return 1.0 - dice


def dice_loss_ref(inputs, targets, smooth=1.0):
    s = jax.nn.sigmoid(inputs.reshape(-1).astype(jnp.float32))
    t = targets.reshape(-1).astype(jnp.float32)
    inter = jnp.sum(s * t)
    dice = (2.0 * inter + smooth) / (jnp.sum(s) + jnp.sum(t) + smooth)
    return 1.0 - dice


if __name__ == "__main__":
    key = jax.random.PRNGKey(0)
    ks = jax.random.split(key, 10)

    def check(out, ref, tag):
        assert jnp.allclose(out, ref, rtol=1e-5, atol=1e-5), (tag, out, ref)

    # Case 1: standard NCHW logits/mask, n % 128 == 0 -> no pad, single block.
    x1 = jax.random.normal(ks[0], (2, 4, 16, 16), dtype=jnp.float32)
    t1 = (jax.random.uniform(ks[1], (2, 4, 16, 16)) > 0.5).astype(jnp.float32)
    check(jax.block_until_ready(dice_loss(x1, t1, smooth=1.0)),
          dice_loss_ref(x1, t1, smooth=1.0), "case1")

    # Case 2: ragged element count (not a multiple of 128) -> pad + gated mask.
    x2_ = jax.random.normal(ks[2], (2, 3, 17, 19), dtype=jnp.float32)
    t2_ = (jax.random.uniform(ks[3], (2, 3, 17, 19)) > 0.5).astype(jnp.float32)
    check(jax.block_until_ready(dice_loss(x2_, t2_)),
          dice_loss_ref(x2_, t2_), "case2")

    # Case 3: multi-block grid, 2-way split, clean (unmasked) accumulation.
    x3 = jax.random.normal(ks[4], (2, 1, 96, 128), dtype=jnp.float32)
    t3 = (jax.random.uniform(ks[5], (2, 1, 96, 128)) > 0.5).astype(jnp.float32)
    check(jax.block_until_ready(
              dice_loss(x3, t3, max_tile_rows=32, num_splits=2)),
          dice_loss_ref(x3, t3), "case3")

    # Case 4: odd block count with split -> clamped duplicate block skipped,
    # plus a partial last block whose mask is gated by pl.when.
    x4 = jax.random.normal(ks[6], (2, 1, 100, 128), dtype=jnp.float32)
    t4 = (jax.random.uniform(ks[7], (2, 1, 100, 128)) > 0.5).astype(jnp.float32)
    check(jax.block_until_ready(
              dice_loss(x4, t4, max_tile_rows=32, num_splits=2)),
          dice_loss_ref(x4, t4), "case4")

    # Case 5: bf16 logits stream in their native dtype (cast to f32 in-kernel).
    x5 = jax.random.normal(ks[8], (2, 4, 16, 16), dtype=jnp.bfloat16)
    t5 = (jax.random.uniform(ks[9], (2, 4, 16, 16)) > 0.5).astype(jnp.float32)
    check(jax.block_until_ready(dice_loss(x5, t5)),
          dice_loss_ref(x5, t5), "case5")

    print("KERNEL_OK")
</pallas_src>

<mosaic_0001>
module attributes {stable_mosaic.version = 11 : i64} {
  func.func @_dice_kernel(%arg0: i32, %arg1: i32, %arg2: memref<32x128xf32, #tpu.memory_space<vmem>>, %arg3: memref<32x128xf32, #tpu.memory_space<vmem>>, %arg4: memref<1x2x8x128xf32, #tpu.memory_space<vmem>>) attributes {dimension_semantics = [#tpu.dimension_semantics<parallel>, #tpu.dimension_semantics<arbitrary>], iteration_bounds = array<i64: 1, 1>, scalar_prefetch = 0 : i64, scratch_operands = 0 : i64, tpu.core_type = #tpu.core_type<tc>, window_params = [{transform_indices = @transform_0, window_bounds = array<i64: 32, 128>}, {transform_indices = @transform_1, window_bounds = array<i64: 32, 128>}, {transform_indices = @transform_2, window_bounds = array<i64: 1, 2, 8, 128>}]} {
    %c1_i32 = arith.constant 1 : i32
    %0 = arith.muli %arg0, %c1_i32 : i32
    %1 = arith.addi %0, %arg1 : i32
    %c0_i32 = arith.constant 0 : i32
    %2 = arith.cmpi eq, %arg1, %c0_i32 : i32
    %3 = arith.extui %2 : i1 to i32
    %c0_i32_0 = arith.constant 0 : i32
    %4 = arith.cmpi ne, %3, %c0_i32_0 : i32
    scf.if %4 {
      %cst = arith.constant 0.000000e+00 : f32
      %11 = vector.broadcast %cst : f32 to vector<1x2x8x128xf32>
      %c0 = arith.constant 0 : index
      %c0_5 = arith.constant 0 : index
      %c0_6 = arith.constant 0 : index
      %c0_7 = arith.constant 0 : index
      %12 = vector.load %arg4[%c0, %c0_5, %c0_6, %c0_7] : memref<1x2x8x128xf32, #tpu.memory_space<vmem>>, vector<1x2x8x128xf32>
      tpu.vector_store %arg4[%c0, %c0_5, %c0_6, %c0_7], %11 {strides = array<i32>} : memref<1x2x8x128xf32, #tpu.memory_space<vmem>>, vector<1x2x8x128xf32>,
    } else {
    }
    %c0_i32_1 = arith.constant 0 : i32
    %5 = arith.cmpi eq, %1, %c0_i32_1 : i32
    %6 = arith.extui %5 : i1 to i32
    %c0_i32_2 = arith.constant 0 : i32
    %7 = arith.cmpi ne, %6, %c0_i32_2 : i32
    scf.if %7 {
      %c0 = arith.constant 0 : index
      %c0_5 = arith.constant 0 : index
      %11 = vector.load %arg2[%c0, %c0_5] : memref<32x128xf32, #tpu.memory_space<vmem>>, vector<32x128xf32>
      %12 = arith.negf %11 : vector<32x128xf32>
      %13 = math.exp %12 : vector<32x128xf32>
      %cst = arith.constant 1.000000e+00 : f32
      %14 = vector.broadcast %cst : f32 to vector<32x128xf32>
      %15 = arith.addf %14, %13 : vector<32x128xf32>
      %16 = arith.divf %14, %15 : vector<32x128xf32>
      %c0_6 = arith.constant 0 : index
      %c0_7 = arith.constant 0 : index
      %17 = vector.load %arg3[%c0_6, %c0_7] : memref<32x128xf32, #tpu.memory_space<vmem>>, vector<32x128xf32>
      %18 = tpu.iota {dimensions = array<i32: 0>} : vector<32x128xi32>
      %19 = tpu.iota {dimensions = array<i32: 1>} : vector<32x128xi32>
      %c32_i32 = arith.constant 32 : i32
      %20 = arith.muli %1, %c32_i32 : i32
      %21 = vector.broadcast %20 : i32 to vector<32x128xi32>
      %22 = arith.addi %21, %18 : vector<32x128xi32>
      %c16_i32 = arith.constant 16 : i32
      %23 = vector.broadcast %c16_i32 : i32 to vector<32x128xi32>
      %24 = arith.cmpi slt, %22, %23 : vector<32x128xi32>
      %c16_i32_8 = arith.constant 16 : i32
      %25 = vector.broadcast %c16_i32_8 : i32 to vector<32x128xi32>
      %26 = arith.cmpi eq, %22, %25 : vector<32x128xi32>
      %c0_i32_9 = arith.constant 0 : i32
      %27 = vector.broadcast %c0_i32_9 : i32 to vector<32x128xi32>
      %28 = arith.cmpi slt, %19, %27 : vector<32x128xi32>
      %29 = arith.andi %26, %28 : vector<32x128xi1>
      %30 = arith.ori %24, %29 : vector<32x128xi1>
      %cst_10 = arith.constant 0.000000e+00 : f32
      %31 = vector.broadcast %cst_10 : f32 to vector<32x128xf32>
      %32 = arith.select %30, %16, %31 : vector<32x128xi1>, vector<32x128xf32>
      %cst_11 = arith.constant 0.000000e+00 : f32
      %33 = vector.broadcast %cst_11 : f32 to vector<32x128xf32>
      %34 = arith.select %30, %17, %33 : vector<32x128xi1>, vector<32x128xf32>
      %c0_12 = arith.constant 0 : index
      %c0_13 = arith.constant 0 : index
      %c0_14 = arith.constant 0 : index
      %c0_15 = arith.constant 0 : index
      %35 = vector.load %arg4[%c0_12, %c0_13, %c0_14, %c0_15] : memref<1x2x8x128xf32, #tpu.memory_space<vmem>>, vector<1x1x8x128xf32>
      %36 = vector.shape_cast %35 : vector<1x1x8x128xf32> to vector<8x128xf32>
      %37 = arith.mulf %32, %34 : vector<32x128xf32>
      %38 = vector.shape_cast %37 : vector<32x128xf32> to vector<4x8x128xf32>
      %cst_16 = arith.constant dense<0.000000e+00> : vector<8x128xf32>
      %39 = vector.multi_reduction <add>, %38, %cst_16 [0] : vector<4x8x128xf32> to vector<8x128xf32>
      %40 = arith.addf %36, %39 : vector<8x128xf32>
      %c0_17 = arith.constant 0 : index
      %c0_18 = arith.constant 0 : index
      %c0_19 = arith.constant 0 : index
      %c0_20 = arith.constant 0 : index
      %41 = vector.load %arg4[%c0_17, %c0_18, %c0_19, %c0_20] : memref<1x2x8x128xf32, #tpu.memory_space<vmem>>, vector<1x1x8x128xf32>
      %42 = vector.shape_cast %41 : vector<1x1x8x128xf32> to vector<8x128xf32>
      %43 = vector.shape_cast %40 : vector<8x128xf32> to vector<1x1x8x128xf32>
      tpu.vector_store %arg4[%c0_17, %c0_18, %c0_19, %c0_20], %43 {strides = array<i32>} : memref<1x2x8x128xf32, #tpu.memory_space<vmem>>, vector<1x1x8x128xf32>,
      %c0_21 = arith.constant 0 : index
      %c1 = arith.constant 1 : index
      %c0_22 = arith.constant 0 : index
      %c0_23 = arith.constant 0 : index
      %44 = vector.load %arg4[%c0_21, %c1, %c0_22, %c0_23] : memref<1x2x8x128xf32, #tpu.memory_space<vmem>>, vector<1x1x8x128xf32>
      %45 = vector.shape_cast %44 : vector<1x1x8x128xf32> to vector<8x128xf32>
      %46 = arith.addf %32, %34 : vector<32x128xf32>
      %47 = vector.shape_cast %46 : vector<32x128xf32> to vector<4x8x128xf32>
      %cst_24 = arith.constant dense<0.000000e+00> : vector<8x128xf32>
      %48 = vector.multi_reduction <add>, %47, %cst_24 [0] : vector<4x8x128xf32> to vector<8x128xf32>
      %49 = arith.addf %45, %48 : vector<8x128xf32>
      %c0_25 = arith.constant 0 : index
      %c1_26 = arith.constant 1 : index
      %c0_27 = arith.constant 0 : index
      %c0_28 = arith.constant 0 : index
      %50 = vector.load %arg4[%c0_25, %c1_26, %c0_27, %c0_28] : memref<1x2x8x128xf32, #tpu.memory_space<vmem>>, vector<1x1x8x128xf32>
      %51 = vector.shape_cast %50 : vector<1x1x8x128xf32> to vector<8x128xf32>
      %52 = vector.shape_cast %49 : vector<8x128xf32> to vector<1x1x8x128xf32>
      tpu.vector_store %arg4[%c0_25, %c1_26, %c0_27, %c0_28], %52 {strides = array<i32>} : memref<1x2x8x128xf32, #tpu.memory_space<vmem>>, vector<1x1x8x128xf32>,
    } else {
    }
    %c0_i32_3 = arith.constant 0 : i32
    %8 = arith.cmpi ne, %1, %c0_i32_3 : i32
    %9 = arith.extui %8 : i1 to i32
    %c0_i32_4 = arith.constant 0 : i32
    %10 = arith.cmpi ne, %9, %c0_i32_4 : i32
    scf.if %10 {
      %c0 = arith.constant 0 : index
      %c0_5 = arith.constant 0 : index
      %11 = vector.load %arg2[%c0, %c0_5] : memref<32x128xf32, #tpu.memory_space<vmem>>, vector<32x128xf32>
      %12 = arith.negf %11 : vector<32x128xf32>
      %13 = math.exp %12 : vector<32x128xf32>
      %cst = arith.constant 1.000000e+00 : f32
      %14 = vector.broadcast %cst : f32 to vector<32x128xf32>
      %15 = arith.addf %14, %13 : vector<32x128xf32>
      %16 = arith.divf %14, %15 : vector<32x128xf32>
      %c0_6 = arith.constant 0 : index
      %c0_7 = arith.constant 0 : index
      %17 = vector.load %arg3[%c0_6, %c0_7] : memref<32x128xf32, #tpu.memory_space<vmem>>, vector<32x128xf32>
      %c0_8 = arith.constant 0 : index
      %c0_9 = arith.constant 0 : index
      %c0_10 = arith.constant 0 : index
      %c0_11 = arith.constant 0 : index
      %18 = vector.load %arg4[%c0_8, %c0_9, %c0_10, %c0_11] : memref<1x2x8x128xf32, #tpu.memory_space<vmem>>, vector<1x1x8x128xf32>
      %19 = vector.shape_cast %18 : vector<1x1x8x128xf32> to vector<8x128xf32>
      %20 = arith.mulf %16, %17 : vector<32x128xf32>
      %21 = vector.shape_cast %20 : vector<32x128xf32> to vector<4x8x128xf32>
      %cst_12 = arith.constant dense<0.000000e+00> : vector<8x128xf32>
      %22 = vector.multi_reduction <add>, %21, %cst_12 [0] : vector<4x8x128xf32> to vector<8x128xf32>
      %23 = arith.addf %19, %22 : vector<8x128xf32>
      %c0_13 = arith.constant 0 : index
      %c0_14 = arith.constant 0 : index
      %c0_15 = arith.constant 0 : index
      %c0_16 = arith.constant 0 : index
      %24 = vector.load %arg4[%c0_13, %c0_14, %c0_15, %c0_16] : memref<1x2x8x128xf32, #tpu.memory_space<vmem>>, vector<1x1x8x128xf32>
      %25 = vector.shape_cast %24 : vector<1x1x8x128xf32> to vector<8x128xf32>
      %26 = vector.shape_cast %23 : vector<8x128xf32> to vector<1x1x8x128xf32>
      tpu.vector_store %arg4[%c0_13, %c0_14, %c0_15, %c0_16], %26 {strides = array<i32>} : memref<1x2x8x128xf32, #tpu.memory_space<vmem>>, vector<1x1x8x128xf32>,
      %c0_17 = arith.constant 0 : index
      %c1 = arith.constant 1 : index
      %c0_18 = arith.constant 0 : index
      %c0_19 = arith.constant 0 : index
      %27 = vector.load %arg4[%c0_17, %c1, %c0_18, %c0_19] : memref<1x2x8x128xf32, #tpu.memory_space<vmem>>, vector<1x1x8x128xf32>
      %28 = vector.shape_cast %27 : vector<1x1x8x128xf32> to vector<8x128xf32>
      %29 = arith.addf %16, %17 : vector<32x128xf32>
      %30 = vector.shape_cast %29 : vector<32x128xf32> to vector<4x8x128xf32>
      %cst_20 = arith.constant dense<0.000000e+00> : vector<8x128xf32>
      %31 = vector.multi_reduction <add>, %30, %cst_20 [0] : vector<4x8x128xf32> to vector<8x128xf32>
      %32 = arith.addf %28, %31 : vector<8x128xf32>
      %c0_21 = arith.constant 0 : index
      %c1_22 = arith.constant 1 : index
      %c0_23 = arith.constant 0 : index
      %c0_24 = arith.constant 0 : index
      %33 = vector.load %arg4[%c0_21, %c1_22, %c0_23, %c0_24] : memref<1x2x8x128xf32, #tpu.memory_space<vmem>>, vector<1x1x8x128xf32>
      %34 = vector.shape_cast %33 : vector<1x1x8x128xf32> to vector<8x128xf32>
      %35 = vector.shape_cast %32 : vector<8x128xf32> to vector<1x1x8x128xf32>
      tpu.vector_store %arg4[%c0_21, %c1_22, %c0_23, %c0_24], %35 {strides = array<i32>} : memref<1x2x8x128xf32, #tpu.memory_space<vmem>>, vector<1x1x8x128xf32>,
    } else {
    }
    return
  }
  func.func @transform_0(%arg0: i32, %arg1: i32) -> (i32, i32) {
    %c1_i32 = arith.constant 1 : i32
    %0 = arith.muli %arg0, %c1_i32 : i32
    %1 = arith.addi %0, %arg1 : i32
    %c0_i32 = arith.constant 0 : i32
    %2 = arith.minsi %1, %c0_i32 : i32
    %c0_i32_0 = arith.constant 0 : i32
    %c0_i32_1 = arith.constant 0 : i32
    return %2, %c0_i32_0 : i32, i32
  }
  func.func @transform_1(%arg0: i32, %arg1: i32) -> (i32, i32) {
    %c1_i32 = arith.constant 1 : i32
    %0 = arith.muli %arg0, %c1_i32 : i32
    %1 = arith.addi %0, %arg1 : i32
    %c0_i32 = arith.constant 0 : i32
    %2 = arith.minsi %1, %c0_i32 : i32
    %c0_i32_0 = arith.constant 0 : i32
    %c0_i32_1 = arith.constant 0 : i32
    return %2, %c0_i32_0 : i32, i32
  }
  func.func @transform_2(%arg0: i32, %arg1: i32) -> (i32, i32, i32, i32) {
    %c0_i32 = arith.constant 0 : i32
    %c0_i32_0 = arith.constant 0 : i32
    %c0_i32_1 = arith.constant 0 : i32
    %c0_i32_2 = arith.constant 0 : i32
    return %arg0, %c0_i32, %c0_i32_0, %c0_i32_1 : i32, i32, i32, i32
  }
}

</mosaic_0001>

<llo_original>
// kernel: tpu_custom_call.1
$region0: #{tpu_custom_call.1}
  #allocation0 [shape = 'u32[]', space=smem, size = 0x4, offset = 0x4, fixed_abs, tag = 'smem constant byte address 0x4 - core index']
  #allocation1 [shape = 'u32[144,128]{1,0:T(1,128)}', space=vmem, size = 0x12000, scoped, tag = 'internal scratch']
  %s0 = inlined_call_operand.hbm [shape: f32[16,128], index: 0, kind: input, shape index: {}]
  %s1 = inlined_call_operand.hbm [shape: f32[16,128], index: 1, kind: input, shape index: {}]
  %s2 = inlined_call_operand.hbm [shape: f32[1,2,8,128], index: 2, kind: output, shape index: {}]
  %s3 = sld [smem:[#allocation0]]
  $region38: #{tpu_custom_call.1} parent=0
    _
  %s5 = ssub.s32 1, %s3
  %s6 = scalar_select 0, %s5, %s3
  $region1: #{tpu_custom_call.1} parent=0
    #allocation2 [shape = 'u8[16384]{0}', space=vmem, size = 0x4000, scoped, tag = 'input window, operand 0, single buffered']
    #allocation3 [shape = 's32[1]{0}', space=sflag, size = 0x4, scoped, tag = 'scoped memory for tpu_custom_call.1']
    #allocation4 [shape = 's32[1]{0}', space=sflag, size = 0x4, scoped, tag = 'scoped memory for tpu_custom_call.1']
    #allocation5 [shape = 'u8[16384]{0}', space=vmem, size = 0x4000, scoped, tag = 'input window, operand 1, single buffered']
    #allocation6 [shape = 's32[1]{0}', space=sflag, size = 0x4, scoped, tag = 'scoped memory for tpu_custom_call.1']
    #allocation7 [shape = 'u8[8192]{0}', space=vmem, size = 0x2000, scoped, tag = 'output window, operand 0, single buffered']
    %7 = vsyncpa [#allocation3], 0
    %8 = vsyncpa [#allocation6], 0
    %9 = vsyncpa [#allocation4], 0
    // Predicated region
    $region2: #{tpu_custom_call.1} parent=1 // pred_check
      _
    $region3: #{tpu_custom_call.1} parent=1 // pred_check_branch
      %11 = sbr.rel (0) target = $region5
    $region4: #{tpu_custom_call.1} parent=1 // pred_region
      %s12 = sadd.s32 0, 0
      %p13 = scmp.lt.s32.totalorder %s12, 0
      %s14 = scalar_select %p13, %s12, 0
      %s15 = smul.u32 4, %s14
      %s16 = ssub.s32 2, %s15
      %s17 = smul.u32 128, %s16
      %s19 = ssub.s32 512, %s17
      %20 = vsyncadd [#allocation3], %s19
      %p21 = scmp.ne.s32.totalorder 0, %s17
      %s22 = smul.addr %s15, 128
      %s23 = scalar_lea.hbm %s0, %s22
      %s24 = smul.u32 8, %s16
      %s25 = sshll.u32 [#allocation2], 4
      %s26 = int_to_ptr.vmem [resolvable:$true] %s25
      %s27 = sshll.u32 %s24, 4
      %31 = dma.hbm_to_vmem [thread:$0]  (%p21), %s23, %s27, %s26, [#allocation3], 128, 128, 8
    $region5: #{tpu_custom_call.1} parent=1 // pred_fallthru
      _
    // Predicated region
    $region6: #{tpu_custom_call.1} parent=1 // pred_check
      _
    $region7: #{tpu_custom_call.1} parent=1 // pred_check_branch
      %33 = sbr.rel (0) target = $region9
    $region8: #{tpu_custom_call.1} parent=1 // pred_region
      %s34 = sadd.s32 0, 0
      %p35 = scmp.lt.s32.totalorder %s34, 0
      %s36 = scalar_select %p35, %s34, 0
      %s37 = smul.u32 4, %s36
      %s38 = ssub.s32 2, %s37
      %s39 = smul.u32 128, %s38
      %s41 = ssub.s32 512, %s39
      %42 = vsyncadd [#allocation6], %s41
      %p43 = scmp.ne.s32.totalorder 0, %s39
      %s44 = smul.addr %s37, 128
      %s45 = scalar_lea.hbm %s1, %s44
      %s46 = smul.u32 8, %s38
      %s47 = sshll.u32 [#allocation5], 4
      %s48 = int_to_ptr.vmem [resolvable:$true] %s47
      %s49 = sshll.u32 %s46, 4
      %53 = dma.hbm_to_vmem [thread:$0]  (%p43), %s45, %s49, %s48, [#allocation6], 128, 128, 8
    $region9: #{tpu_custom_call.1} parent=1 // pred_fallthru
      _
    // Predicated region
    $region10: #{tpu_custom_call.1} parent=1 // pred_check
      _
    $region11: #{tpu_custom_call.1} parent=1 // pred_check_branch
      %55 = sbr.rel (0) target = $region13
    $region12: #{tpu_custom_call.1} parent=1 // pred_region
      %56 = dma.done [#allocation3], 512
    $region13: #{tpu_custom_call.1} parent=1 // pred_fallthru
      _
    // Predicated region
    $region14: #{tpu_custom_call.1} parent=1 // pred_check
      _
    $region15: #{tpu_custom_call.1} parent=1 // pred_check_branch
      %58 = sbr.rel (0) target = $region17
    $region16: #{tpu_custom_call.1} parent=1 // pred_region
      %59 = dma.done [#allocation6], 512
    $region17: #{tpu_custom_call.1} parent=1 // pred_fallthru
      _
    %s60 = sadd.s32 0, 0
    %p61 = scmp.lt.s32.totalorder %s60, 0
    %s62 = scalar_select %p61, %s60, 0
    %s63 = smul.u32 4, %s62
    %s64 = ssub.s32 2, %s63
    %s65 = smul.u32 128, %s64
    %s66 = sadd.s32 0, 0
    %p67 = scmp.lt.s32.totalorder %s66, 0
    %s68 = scalar_select %p67, %s66, 0
    %s69 = smul.u32 4, %s68
    %s70 = ssub.s32 2, %s69
    %s71 = smul.u32 128, %s70
    %s72 = sadd.s32 0, 0
    %p73 = scmp.eq.s32.totalorder 0, 0
    // Predicated region
    $region18: #{tpu_custom_call.1} parent=1 // pred_check
      %p74 = pneg %p73
    $region19: #{tpu_custom_call.1} parent=1 // pred_check_branch
      %76 = sbr.rel (%p74) target = $region21
    $region20: #{tpu_custom_call.1} parent=1 // pred_region
      %77 = vst [vmem:[#allocation7] sm:$0xff] 0.0
      %78 = vst [vmem:[#allocation7 + $0x8] sm:$0xff] 0.0
    $region21: #{tpu_custom_call.1} parent=1 // pred_fallthru
      _
    %p79 = scmp.eq.s32.totalorder %s72, 0
    // Predicated region
    $region22: #{tpu_custom_call.1} parent=1 // pred_check
      %p80 = pneg %p79
    $region23: #{tpu_custom_call.1} parent=1 // pred_check_branch
      %82 = sbr.rel (%p80) target = $region25
    $region24: #{tpu_custom_call.1} parent=1 // pred_region
      %v83 = vld [vmem:[#allocation2] sm:$0xff]
      %v84 = vld [vmem:[#allocation2 + $0x8] sm:$0xff]
      %v85 = vld [vmem:[#allocation2 + $0x10] sm:$0xff]
      %v86 = vld [vmem:[#allocation2 + $0x18] sm:$0xff]
      %v87 = vxor.u32 %v83, 2147483648
      %v88 = vxor.u32 %v84, 2147483648
      %v89 = vxor.u32 %v85, 2147483648
      %v90 = vxor.u32 %v86, 2147483648
      %v91 = vmul.f32 %v87, 1.442695
      %v92 = vpow.pop %v91
      %v93 = vmul.f32 %v88, 1.442695
      %v94 = vpow.pop %v93
      %v95 = vmul.f32 %v89, 1.442695
      %v96 = vpow.pop %v95
      %v97 = vmul.f32 %v90, 1.442695
      %v98 = vpow.pop %v97
      %v99 = vadd.f32 %v92, 1.0
      %v100 = vadd.f32 %v94, 1.0
      %v101 = vadd.f32 %v96, 1.0
      %v102 = vadd.f32 %v98, 1.0
      %v103 = vrcp.pop %v99
      %v104 = vmul.f32 1.0, %v103
      %v105 = vrcp.pop %v100
      %v106 = vmul.f32 1.0, %v105
      %v107 = vrcp.pop %v101
      %v108 = vmul.f32 1.0, %v107
      %v109 = vrcp.pop %v102
      %v110 = vmul.f32 1.0, %v109
      %v111 = vld [vmem:[#allocation5] sm:$0xff]
      %v112 = vld [vmem:[#allocation5 + $0x8] sm:$0xff]
      %v113 = vld [vmem:[#allocation5 + $0x10] sm:$0xff]
      %v114 = vld [vmem:[#allocation5 + $0x18] sm:$0xff]
      %v115 = vlaneseq
      %v116 = vshrl.u32 %v115, 7
      %v117 = vadd.s32 %v116, 8
      %v118 = vadd.s32 %v116, 16
      %v119 = vadd.s32 %v116, 24
      %v120 = vlaneseq
      %v121 = vand.u32 %v120, 127
      %s122 = smul.u32 %s72, 32
      %v123 = vstv %s122
      %v124 = vadd.s32 %v123, %v116
      %v125 = vadd.s32 %v123, %v117
      %v126 = vadd.s32 %v123, %v118
      %v127 = vadd.s32 %v123, %v119
      %vm128 = vcmp.lt.s32.totalorder %v124, 16
      %vm129 = vcmp.lt.s32.totalorder %v125, 16
      %vm130 = vcmp.lt.s32.totalorder %v126, 16
      %vm131 = vcmp.lt.s32.totalorder %v127, 16
      %vm132 = vcmp.eq.s32.totalorder %v124, 16
      %vm133 = vcmp.eq.s32.totalorder %v125, 16
      %vm134 = vcmp.eq.s32.totalorder %v126, 16
      %vm135 = vcmp.eq.s32.totalorder %v127, 16
      %vm136 = vcmp.lt.s32.totalorder %v121, 0
      %vm137 = vmand %vm132, %vm136
      %vm138 = vmand %vm133, %vm136
      %vm139 = vmand %vm134, %vm136
      %vm140 = vmand %vm135, %vm136
      %vm141 = vmor %vm128, %vm137
      %vm142 = vmor %vm129, %vm138
      %vm143 = vmor %vm130, %vm139
      %vm144 = vmor %vm131, %vm140
      %v145 = vsel %vm141, %v104, 0.0
      %v146 = vsel %vm142, %v106, 0.0
      %v147 = vsel %vm143, %v108, 0.0
      %v148 = vsel %vm144, %v110, 0.0
      %v149 = vsel %vm141, %v111, 0.0
      %v150 = vsel %vm142, %v112, 0.0
      %v151 = vsel %vm143, %v113, 0.0
      %v152 = vsel %vm144, %v114, 0.0
      %v153 = vld [vmem:[#allocation7] sm:$0xff]
      %v154 = vmul.f32 %v145, %v149
      %v155 = vmul.f32 %v146, %v150
      %v156 = vmul.f32 %v147, %v151
      %v157 = vmul.f32 %v148, %v152
      %v158 = vadd.f32 %v154, %v155
      %v159 = vadd.f32 %v158, %v156
      %v160 = vadd.f32 %v159, %v157
      %v161 = vadd.f32 %v153, %v160
      %162 = vst [vmem:[#allocation7] sm:$0xff] %v161
      %s163 = scalar_lea.vmem [#allocation7], 8
      %v164 = vld [vmem:[%s163] sm:$0xff]
      %v165 = vadd.f32 %v145, %v149
      %v166 = vadd.f32 %v146, %v150
      %v167 = vadd.f32 %v147, %v151
      %v168 = vadd.f32 %v148, %v152
      %v169 = vadd.f32 %v165, %v166
      %v170 = vadd.f32 %v169, %v167
      %v171 = vadd.f32 %v170, %v168
      %v172 = vadd.f32 %v164, %v171
      %173 = vst [vmem:[%s163] sm:$0xff] %v172
    $region25: #{tpu_custom_call.1} parent=1 // pred_fallthru
      _
    %p174 = scmp.ne.s32.totalorder %s72, 0
    // Predicated region
    $region26: #{tpu_custom_call.1} parent=1 // pred_check
      %p175 = pneg %p174
    $region27: #{tpu_custom_call.1} parent=1 // pred_check_branch
      %177 = sbr.rel (%p175) target = $region29
    $region28: #{tpu_custom_call.1} parent=1 // pred_region
      %v178 = vld [vmem:[#allocation2] sm:$0xff]
      %v179 = vld [vmem:[#allocation2 + $0x8] sm:$0xff]
      %v180 = vld [vmem:[#allocation2 + $0x10] sm:$0xff]
      %v181 = vld [vmem:[#allocation2 + $0x18] sm:$0xff]
      %v182 = vxor.u32 %v178, 2147483648
      %v183 = vxor.u32 %v179, 2147483648
      %v184 = vxor.u32 %v180, 2147483648
      %v185 = vxor.u32 %v181, 2147483648
      %v186 = vmul.f32 %v182, 1.442695
      %v187 = vpow.pop %v186
      %v188 = vmul.f32 %v183, 1.442695
      %v189 = vpow.pop %v188
      %v190 = vmul.f32 %v184, 1.442695
      %v191 = vpow.pop %v190
      %v192 = vmul.f32 %v185, 1.442695
      %v193 = vpow.pop %v192
      %v194 = vadd.f32 %v187, 1.0
      %v195 = vadd.f32 %v189, 1.0
      %v196 = vadd.f32 %v191, 1.0
      %v197 = vadd.f32 %v193, 1.0
      %v198 = vrcp.pop %v194
      %v199 = vmul.f32 1.0, %v198
      %v200 = vrcp.pop %v195
      %v201 = vmul.f32 1.0, %v200
      %v202 = vrcp.pop %v196
      %v203 = vmul.f32 1.0, %v202
      %v204 = vrcp.pop %v197
      %v205 = vmul.f32 1.0, %v204
      %v206 = vld [vmem:[#allocation5] sm:$0xff]
      %v207 = vld [vmem:[#allocation5 + $0x8] sm:$0xff]
      %v208 = vld [vmem:[#allocation5 + $0x10] sm:$0xff]
      %v209 = vld [vmem:[#allocation5 + $0x18] sm:$0xff]
      %v210 = vld [vmem:[#allocation7] sm:$0xff]
      %v211 = vmul.f32 %v199, %v206
      %v212 = vmul.f32 %v201, %v207
      %v213 = vmul.f32 %v203, %v208
      %v214 = vmul.f32 %v205, %v209
      %v215 = vadd.f32 %v211, %v212
      %v216 = vadd.f32 %v215, %v213
      %v217 = vadd.f32 %v216, %v214
      %v218 = vadd.f32 %v210, %v217
      %219 = vst [vmem:[#allocation7] sm:$0xff] %v218
      %s220 = scalar_lea.vmem [#allocation7], 8
      %v221 = vld [vmem:[%s220] sm:$0xff]
      %v222 = vadd.f32 %v199, %v206
      %v223 = vadd.f32 %v201, %v207
      %v224 = vadd.f32 %v203, %v208
      %v225 = vadd.f32 %v205, %v209
      %v226 = vadd.f32 %v222, %v223
      %v227 = vadd.f32 %v226, %v224
      %v228 = vadd.f32 %v227, %v225
      %v229 = vadd.f32 %v221, %v228
      %230 = vst [vmem:[%s220] sm:$0xff] %v229
    $region29: #{tpu_custom_call.1} parent=1 // pred_fallthru
      _
    // Predicated region
    $region30: #{tpu_custom_call.1} parent=1 // pred_check
      _
    $region31: #{tpu_custom_call.1} parent=1 // pred_check_branch
      %232 = sbr.rel (0) target = $region33
    $region32: #{tpu_custom_call.1} parent=1 // pred_region
      %s234 = ssub.s32 256, 256
      %235 = vsyncadd [#allocation4], %s234
      %s236 = sshll.u32 [#allocation7], 4
      %s237 = int_to_ptr.vmem [resolvable:$true] %s236
      %242 = dma.vmem_to_hbm [thread:$0]  %s237, 256, %s2, [#allocation4], 128, 128, 8
    $region33: #{tpu_custom_call.1} parent=1 // pred_fallthru
      _
    // Predicated region
    $region34: #{tpu_custom_call.1} parent=1 // pred_check
      _
    $region35: #{tpu_custom_call.1} parent=1 // pred_check_branch
      %244 = sbr.rel (0) target = $region37
    $region36: #{tpu_custom_call.1} parent=1 // pred_region
      %245 = dma.done [#allocation4], 256
    $region37: #{tpu_custom_call.1} parent=1 // pred_fallthru
      _
    %246 = vsyncpa [#allocation3], 1
    %247 = vsyncpa [#allocation6], 1
    %248 = vsyncpa [#allocation4], 1

</llo_original>
